<compile_context>
chip_gen: v7x
topology: tpu7x:2x2x1
jax: 0.10.0
libtpu: 0.0.40
codegen_flags: <defaults>
</compile_context>

<pallas_src>
import functools

import jax
import jax.numpy as jnp
from jax.experimental import pallas as pl
from jax.experimental.pallas import tpu as pltpu


def _move_head_kernel(x_ref, nw_ref, wo_ref, o_ref, *, eps):
    # --- RMSNorm (matches torch: x.float(), rsqrt(mean(x^2)+eps), .type_as(x)) ---
    x32 = x_ref[...].astype(jnp.float32)                     # x.float()
    ms = jnp.mean(x32 * x32, axis=-1, keepdims=True)         # pow(2).mean(-1)
    inv = jax.lax.rsqrt(ms + eps)                            # rsqrt(. + eps)
    normed = (x32 * inv).astype(x_ref.dtype)                 # .type_as(x)
    scaled = normed.astype(jnp.float32) * nw_ref[...]        # * weight (f32 promotion)
    # --- Linear (no bias) + .float(): [tm, dim] @ [dim, tn] on the MXU ---
    o_ref[...] = jnp.dot(scaled, wo_ref[...].astype(jnp.float32),
                         preferred_element_type=jnp.float32)


def _round_up(x, m):
    return (x + m - 1) // m * m


def move_head(h, norm_weight, output_weight, eps=1e-5, *,
              row_tile_target=256, vocab_tile_target=256,
              vmem_budget_bytes=28 * 1024 * 1024):
    """h: [..., dim]; norm_weight: [dim]; output_weight: [vocab, dim].
    Returns float32 [..., vocab] = Linear(RMSNorm(h))."""
    orig_shape = h.shape
    dim = orig_shape[-1]
    vocab, wdim = output_weight.shape
    assert wdim == dim, (output_weight.shape, dim)

    rows = 1
    for s in orig_shape[:-1]:
        rows *= s

    x2d = h.reshape(rows, dim)
    nw2d = norm_weight.astype(jnp.float32).reshape(1, dim)
    woT = output_weight.T                                    # [dim, vocab]

    xb = x2d.dtype.itemsize
    wb = woT.dtype.itemsize

    # Tile selection: sublane-packed row tile, lane-dense (128-multiple) vocab tile.
    tm = min(row_tile_target, _round_up(rows, 8))
    tn = min(vocab_tile_target, _round_up(vocab, 128))

    def step_bytes(tm_, tn_):
        return tm_ * dim * xb + dim * tn_ * wb + tm_ * tn_ * 4 + dim * 4

    # Keep the double-buffered working set inside the VMEM budget
    # (conservative enough for v7x's smaller 64 MiB physical / 32 MiB scoped VMEM).
    while tm > 8 and 2 * step_bytes(tm, tn) > vmem_budget_bytes:
        tm = max(8, (tm // 2) // 8 * 8)
    while tn > 128 and 2 * step_bytes(tm, tn) > vmem_budget_bytes:
        tn = max(128, (tn // 2) // 128 * 128)

    # Pad (instead of collapsing to one giant block) so tiles always divide.
    rows_p = _round_up(rows, tm)
    vocab_p = _round_up(vocab, tn)
    if rows_p != rows:
        x2d = jnp.pad(x2d, ((0, rows_p - rows), (0, 0)))
    if vocab_p != vocab:
        woT = jnp.pad(woT, ((0, 0), (0, vocab_p - vocab)))

    grid = (rows_p // tm, vocab_p // tn)
    kernel = functools.partial(_move_head_kernel, eps=eps)

    cost = pl.CostEstimate(
        flops=2 * rows * vocab * dim + 4 * rows * dim,
        transcendentals=rows,
        bytes_accessed=rows * dim * xb + dim * vocab * wb + dim * 4
        + rows * vocab * 4,
    )

    out = pl.pallas_call(
        kernel,
        out_shape=jax.ShapeDtypeStruct((rows_p, vocab_p), jnp.float32),
        grid_spec=pltpu.PrefetchScalarGridSpec(
            num_scalar_prefetch=0,
            grid=grid,
            in_specs=[
                pl.BlockSpec((tm, dim), lambda i, j: (i, 0)),   # activations
                pl.BlockSpec((1, dim), lambda i, j: (0, 0)),    # RMSNorm weight
                pl.BlockSpec((dim, tn), lambda i, j: (0, j)),   # output proj (dim, vocab)
            ],
            out_specs=pl.BlockSpec((tm, tn), lambda i, j: (i, j)),
        ),
        compiler_params=pltpu.CompilerParams(
            dimension_semantics=("parallel", "parallel")),
        cost_estimate=cost,
    )(x2d, nw2d, woT)

    out = out[:rows, :vocab]
    return out.reshape(orig_shape[:-1] + (vocab,))


def move_head_ref(h, norm_weight, output_weight, eps=1e-5):
    x32 = h.astype(jnp.float32)
    inv = jax.lax.rsqrt(jnp.mean(x32 * x32, axis=-1, keepdims=True) + eps)
    normed = (x32 * inv).astype(h.dtype)
    scaled = normed.astype(jnp.float32) * norm_weight.astype(jnp.float32)
    return jnp.dot(scaled, output_weight.T.astype(jnp.float32))


if __name__ == "__main__":
    key = jax.random.PRNGKey(0)
    batch, seq, dim, vocab = 2, 8, 32, 256
    k1, k2 = jax.random.split(key)

    h = jax.random.normal(k1, (batch, seq, dim), dtype=jnp.float32)
    # RMSNorm: nn.Parameter(torch.ones(dim))
    norm_weight = jnp.ones((dim,), dtype=jnp.float32)
    # nn.Linear(dim, vocab, bias=False) weight, deterministic init
    output_weight = (jax.random.normal(k2, (vocab, dim), dtype=jnp.float32)
                     / jnp.sqrt(jnp.float32(dim)))

    out = move_head(h, norm_weight, output_weight, eps=1e-5)
    out = jax.block_until_ready(out)

    ref = move_head_ref(h, norm_weight, output_weight, eps=1e-5)
    assert out.shape == (batch, seq, vocab), out.shape
    assert out.dtype == jnp.float32, out.dtype
    assert jnp.allclose(out, ref, atol=1e-4, rtol=1e-4), \
        float(jnp.max(jnp.abs(out - ref)))
    print("KERNEL_OK")
</pallas_src>

<mosaic_0001>
module attributes {stable_mosaic.version = 11 : i64} {
  func.func @_move_head_kernel(%arg0: i32, %arg1: i32, %arg2: memref<16x32xf32, #tpu.memory_space<vmem>>, %arg3: memref<1x32xf32, #tpu.memory_space<vmem>>, %arg4: memref<32x256xf32, #tpu.memory_space<vmem>>, %arg5: memref<16x256xf32, #tpu.memory_space<vmem>>) attributes {dimension_semantics = [#tpu.dimension_semantics<parallel>, #tpu.dimension_semantics<parallel>], iteration_bounds = array<i64: 1, 1>, scalar_prefetch = 0 : i64, scratch_operands = 0 : i64, tpu.core_type = #tpu.core_type<tc>, window_params = [{transform_indices = @transform_0, window_bounds = array<i64: 16, 32>}, {pipeline_mode = #tpu.pipeline_mode<synchronous>, transform_indices = @transform_1, window_bounds = array<i64: 1, 32>}, {transform_indices = @transform_2, window_bounds = array<i64: 32, 256>}, {transform_indices = @transform_3, window_bounds = array<i64: 16, 256>}]} {
    %c0 = arith.constant 0 : index
    %c0_0 = arith.constant 0 : index
    %0 = vector.load %arg2[%c0, %c0_0] : memref<16x32xf32, #tpu.memory_space<vmem>>, vector<16x32xf32>
    %1 = arith.mulf %0, %0 : vector<16x32xf32>
    %cst = arith.constant dense<0.000000e+00> : vector<16xf32>
    %2 = vector.multi_reduction <add>, %1, %cst [1] : vector<16x32xf32> to vector<16xf32>
    %3 = vector.shape_cast %2 : vector<16xf32> to vector<16x1xf32>
    %cst_1 = arith.constant 3.200000e+01 : f32
    %4 = vector.broadcast %cst_1 : f32 to vector<16x1xf32>
    %5 = arith.divf %3, %4 : vector<16x1xf32>
    %cst_2 = arith.constant 9.99999974E-6 : f32
    %6 = vector.broadcast %cst_2 : f32 to vector<16x1xf32>
    %7 = arith.addf %5, %6 : vector<16x1xf32>
    %8 = math.rsqrt %7 : vector<16x1xf32>
    %9 = vector.broadcast %8 : vector<16x1xf32> to vector<16x32xf32>
    %10 = arith.mulf %0, %9 : vector<16x32xf32>
    %c0_3 = arith.constant 0 : index
    %c0_4 = arith.constant 0 : index
    %11 = vector.load %arg3[%c0_3, %c0_4] : memref<1x32xf32, #tpu.memory_space<vmem>>, vector<1x32xf32>
    %12 = vector.broadcast %11 : vector<1x32xf32> to vector<16x32xf32>
    %13 = arith.mulf %10, %12 : vector<16x32xf32>
    %c0_5 = arith.constant 0 : index
    %c0_6 = arith.constant 0 : index
    %14 = vector.load %arg4[%c0_5, %c0_6] : memref<32x256xf32, #tpu.memory_space<vmem>>, vector<32x256xf32>
    %cst_7 = arith.constant dense<0.000000e+00> : vector<16x256xf32>
    %15 = tpu.matmul %13, %14, %cst_7 {dimension_numbers = #tpu.dot_dimension_numbers<[1], [0], [0], [1], [0, 0, 1, 1], [], []>} : vector<16x32xf32>, vector<32x256xf32>, vector<16x256xf32> -> vector<16x256xf32>
    %c0_8 = arith.constant 0 : index
    %c0_9 = arith.constant 0 : index
    %16 = vector.load %arg5[%c0_8, %c0_9] : memref<16x256xf32, #tpu.memory_space<vmem>>, vector<16x256xf32>
    tpu.vector_store %arg5[%c0_8, %c0_9], %15 {strides = array<i32>} : memref<16x256xf32, #tpu.memory_space<vmem>>, vector<16x256xf32>,
    return
  }
  func.func @transform_0(%arg0: i32, %arg1: i32) -> (i32, i32) {
    %c0_i32 = arith.constant 0 : i32
    %c0_i32_0 = arith.constant 0 : i32
    return %arg0, %c0_i32 : i32, i32
  }
  func.func @transform_1(%arg0: i32, %arg1: i32) -> (i32, i32) {
    %c0_i32 = arith.constant 0 : i32
    %c0_i32_0 = arith.constant 0 : i32
    %c0_i32_1 = arith.constant 0 : i32
    return %c0_i32, %c0_i32_0 : i32, i32
  }
  func.func @transform_2(%arg0: i32, %arg1: i32) -> (i32, i32) {
    %c0_i32 = arith.constant 0 : i32
    %c0_i32_0 = arith.constant 0 : i32
    return %c0_i32, %arg1 : i32, i32
  }
  func.func @transform_3(%arg0: i32, %arg1: i32) -> (i32, i32) {
    %c0_i32 = arith.constant 0 : i32
    return %arg0, %arg1 : i32, i32
  }
}

</mosaic_0001>

<llo_original>
// kernel: tpu_custom_call.1
$region0: #{tpu_custom_call.1}
  #allocation0 [shape = 'u32[]', space=smem, size = 0x4, offset = 0x4, fixed_abs, tag = 'smem constant byte address 0x4 - core index']
  #allocation1 [shape = 'u32[144,128]{1,0:T(1,128)}', space=vmem, size = 0x12000, scoped, tag = 'internal scratch']
  %s0 = inlined_call_operand.hbm [shape: f32[16,32], index: 0, kind: input, shape index: {}]
  %s1 = inlined_call_operand.vmem [shape: f32[1,32], index: 1, kind: input, shape index: {}]
  %s2 = inlined_call_operand.hbm [shape: f32[32,256], index: 2, kind: input, shape index: {}]
  %s3 = inlined_call_operand.hbm [shape: f32[16,256], index: 3, kind: output, shape index: {}]
  %s4 = sld [smem:[#allocation0]]
  $region30: #{tpu_custom_call.1} parent=0
    _
  %s6 = ssub.s32 1, %s4
  %s7 = scalar_select 0, %s6, %s4
  $region1: #{tpu_custom_call.1} parent=0
    #allocation2 [shape = 'u8[8192]{0}', space=vmem, size = 0x2000, scoped, tag = 'input window, operand 0, single buffered']
    #allocation3 [shape = 's32[1]{0}', space=sflag, size = 0x4, scoped, tag = 'scoped memory for tpu_custom_call.1']
    #allocation4 [shape = 's32[1]{0}', space=sflag, size = 0x4, scoped, tag = 'scoped memory for tpu_custom_call.1']
    #allocation5 [shape = 'u8[32768]{0}', space=vmem, size = 0x8000, scoped, tag = 'input window, operand 2, single buffered']
    #allocation6 [shape = 's32[1]{0}', space=sflag, size = 0x4, scoped, tag = 'scoped memory for tpu_custom_call.1']
    #allocation7 [shape = 'u8[16384]{0}', space=vmem, size = 0x4000, scoped, tag = 'output window, operand 0, single buffered']
    %8 = vsyncpa [#allocation3], 0
    %9 = vsyncpa [#allocation6], 0
    %10 = vsyncpa [#allocation4], 0
    // Predicated region
    $region2: #{tpu_custom_call.1} parent=1 // pred_check
      _
    $region3: #{tpu_custom_call.1} parent=1 // pred_check_branch
      %12 = sbr.rel (0) target = $region5
    $region4: #{tpu_custom_call.1} parent=1 // pred_region
      %s14 = ssub.s32 256, 256
      %15 = vsyncadd [#allocation3], %s14
      %s16 = sshll.u32 [#allocation2], 4
      %s17 = int_to_ptr.vmem [resolvable:$true] %s16
      %22 = dma.hbm_to_vmem [thread:$0]  %s0, 256, %s17, [#allocation3], 128, 128, 8
    $region5: #{tpu_custom_call.1} parent=1 // pred_fallthru
      _
    // Predicated region
    $region6: #{tpu_custom_call.1} parent=1 // pred_check
      _
    $region7: #{tpu_custom_call.1} parent=1 // pred_check_branch
      %24 = sbr.rel (0) target = $region9
    $region8: #{tpu_custom_call.1} parent=1 // pred_region
      _
    $region9: #{tpu_custom_call.1} parent=1 // pred_fallthru
      _
    // Predicated region
    $region10: #{tpu_custom_call.1} parent=1 // pred_check
      _
    $region11: #{tpu_custom_call.1} parent=1 // pred_check_branch
      %26 = sbr.rel (0) target = $region13
    $region12: #{tpu_custom_call.1} parent=1 // pred_region
      %s28 = ssub.s32 1024, 1024
      %29 = vsyncadd [#allocation6], %s28
      %s30 = sshll.u32 [#allocation5], 4
      %s31 = int_to_ptr.vmem [resolvable:$true] %s30
      %36 = dma.hbm_to_vmem [thread:$0]  %s2, 1024, %s31, [#allocation6], 256, 256, 16
    $region13: #{tpu_custom_call.1} parent=1 // pred_fallthru
      _
    // Predicated region
    $region14: #{tpu_custom_call.1} parent=1 // pred_check
      _
    $region15: #{tpu_custom_call.1} parent=1 // pred_check_branch
      %38 = sbr.rel (0) target = $region17
    $region16: #{tpu_custom_call.1} parent=1 // pred_region
      %39 = dma.done [#allocation3], 256
    $region17: #{tpu_custom_call.1} parent=1 // pred_fallthru
      _
    // Predicated region
    $region18: #{tpu_custom_call.1} parent=1 // pred_check
      _
    $region19: #{tpu_custom_call.1} parent=1 // pred_check_branch
      %41 = sbr.rel (0) target = $region21
    $region20: #{tpu_custom_call.1} parent=1 // pred_region
      %42 = dma.done [#allocation6], 1024
    $region21: #{tpu_custom_call.1} parent=1 // pred_fallthru
      _
    %v43 = vld [vmem:[#allocation2] sm:$0xff]
    %v44 = vld [vmem:[#allocation2 + $0x8] sm:$0xff]
    %v45 = vmul.f32 %v43, %v43
    %v46 = vmul.f32 %v44, %v44
    %vm47 = vcmask 261120
    %v48 = vsel %vm47, %v45, 0.0
    %49 = vadd.xlane.f32.xlu0 %v48
    %v50 = vpop.xlane.xlu0 %49
    %v51 = vsel %vm47, %v46, 0.0
    %52 = vadd.xlane.f32.xlu0 %v51
    %v53 = vpop.xlane.xlu0 %52
    %v54 = vrcp.pop 32.0
    %v55 = vmul.f32 %v50, %v54
    %v56 = vmul.f32 %v53, %v54
    %v57 = vadd.f32 %v55, 1e-05
    %v58 = vadd.f32 %v56, 1e-05
    %v59 = vrsqrt.pop %v57
    %v60 = vrsqrt.pop %v58
    %v61 = vmul.f32 %v43, %v59
    %v62 = vmul.f32 %v44, %v60
    %v63 = vld [vmem:[%s1] sm:$0x1]
    %v65 = vlaneseq
    %v66 = vshrl.u32 %v65, 7
    %v67 = vsub.s32 0, %v66
    %v68 = vrot.slane %v63, %v67
    %v70 = vmul.f32 %v61, %v68
    %v71 = vmul.f32 %v62, %v68
    %v72 = vld [vmem:[#allocation5] sm:$0xff]
    %v73 = vld [vmem:[#allocation5 + $0x8] sm:$0xff]
    %v74 = vld [vmem:[#allocation5 + $0x10] sm:$0xff]
    %v75 = vld [vmem:[#allocation5 + $0x18] sm:$0xff]
    %v76 = vld [vmem:[#allocation5 + $0x20] sm:$0xff]
    %v77 = vld [vmem:[#allocation5 + $0x28] sm:$0xff]
    %v78 = vld [vmem:[#allocation5 + $0x30] sm:$0xff]
    %v79 = vld [vmem:[#allocation5 + $0x38] sm:$0xff]
    %v81 = vsel %vm47, %v70, 0
    %v84 = vsel %vm47, %v71, 0
    %86 = vmatprep.subr.mxu0 %v73
    %87 = vmatpush1.msra.mxu0 %v72
    %88 = vmatprep.subr.mxu0 %v75
    %89 = vmatpush1.msra.mxu0 %v74
    %90 = vmatprep.subr.mxu0 %v77
    %91 = vmatpush1.msra.mxu0 %v76
    %92 = vmatprep.subr.mxu0 %v79
    %93 = vmatpush1.msra.mxu0 %v78
    %94 = vmatprep.subr.mxu0 0.0
    %95 = vmatpush1.msra.mxu0 0.0
    %96 = vmatprep.subr.mxu0 0.0
    %97 = vmatpush1.msra.mxu0 0.0
    %98 = vmatprep.subr.mxu0 0.0
    %99 = vmatpush1.msra.mxu0 0.0
    %100 = vmatprep.subr.mxu0 0.0
    %101 = vmatpush1.msra.mxu0 0.0
    %102 = vmatprep.subr.mxu0 0.0
    %103 = vmatpush1.msra.mxu0 0.0
    %104 = vmatprep.subr.mxu0 0.0
    %105 = vmatpush1.msra.mxu0 0.0
    %106 = vmatprep.subr.mxu0 0.0
    %107 = vmatpush1.msra.mxu0 0.0
    %108 = vmatprep.subr.mxu0 0.0
    %109 = vmatpush1.msra.mxu0 0.0
    %110 = vmatprep.subr.mxu0 0.0
    %111 = vmatpush1.msra.mxu0 0.0
    %112 = vmatprep.subr.mxu0 0.0
    %113 = vmatpush1.msra.mxu0 0.0
    %114 = vmatprep.subr.mxu0 0.0
    %115 = vmatpush1.msra.mxu0 0.0
    %116 = vmatprep.subr.mxu0 0.0
    %117 = vmatpush1.msra.mxu0 0.0
    %118 = vmatprep.subr.mxu0 0.0
    %119 = vmatpush1.msra.mxu0 0.0
    %120 = vmatprep.subr.mxu0 0.0
    %121 = vmatpush1.msra.mxu0 0.0
    %122 = vmatprep.subr.mxu0 0.0
    %123 = vmatpush1.msra.mxu0 0.0
    %124 = vmatprep.subr.mxu0 0.0
    %125 = vmatpush1.msra.mxu0 0.0
    %126 = vmatprep.subr.mxu0 0.0
    %127 = vmatpush1.msra.mxu0 0.0
    %128 = vmatprep.subr.mxu0 0.0
    %129 = vmatpush1.msra.mxu0 0.0
    %130 = vmatprep.subr.mxu0 0.0
    %131 = vmatpush1.msra.mxu0 0.0
    %132 = vmatprep.subr.mxu0 0.0
    %133 = vmatpush1.msra.mxu0 0.0
    %134 = vmatprep.subr.mxu0 0.0
    %135 = vmatpush1.msra.mxu0 0.0
    %136 = vmatprep.subr.mxu0 0.0
    %137 = vmatpush1.msra.mxu0 0.0
    %138 = vmatprep.subr.mxu0 0.0
    %139 = vmatpush1.msra.mxu0 0.0
    %140 = vmatprep.subr.mxu0 0.0
    %141 = vmatpush1.msra.mxu0 0.0
    %142 = vmatprep.subr.mxu0 0.0
    %143 = vmatpush1.msra.mxu0 0.0
    %144 = vmatprep.subr.mxu0 0.0
    %145 = vmatpush1.msra.mxu0 0.0
    %146 = vmatprep.subr.mxu0 0.0
    %147 = vmatpush1.msra.mxu0 0.0
    %148 = vmatprep.subr.mxu0 0.0
    %149 = vmatpush1.msra.mxu0 0.0
    %150 = vmatprep.mubr.f32.mxu0 0.0
    %151 = vmatmul.mubr.f32.gmra.mrb[0].mxu0 %v81
    %v152 = vpop.f32.mrb[0].mxu0
    %v153 = vadd.f32 0.0, %v152
    %v154 = vpop.f32.mrb[0].mxu0
    %v155 = vadd.f32 0.0, %v154
    %156 = vmatprep.mubr.f32.mxu0 0.0
    %157 = vmatmul.mubr.f32.gmra.mrb[0].mxu0 %v84
    %v158 = vpop.f32.mrb[0].mxu0
    %v159 = vadd.f32 0.0, %v158
    %v160 = vpop.f32.mrb[0].mxu0
    %v161 = vadd.f32 0.0, %v160
    %162 = vdwg.mxu0
    %163 = vst [vmem:[#allocation7] sm:$0xff] %v153
    %164 = vst [vmem:[#allocation7 + $0x8] sm:$0xff] %v155
    %165 = vst [vmem:[#allocation7 + $0x10] sm:$0xff] %v159
    %166 = vst [vmem:[#allocation7 + $0x18] sm:$0xff] %v161
    // Predicated region
    $region22: #{tpu_custom_call.1} parent=1 // pred_check
      _
    $region23: #{tpu_custom_call.1} parent=1 // pred_check_branch
      %168 = sbr.rel (0) target = $region25
    $region24: #{tpu_custom_call.1} parent=1 // pred_region
      %s170 = ssub.s32 512, 512
      %171 = vsyncadd [#allocation4], %s170
      %s172 = sshll.u32 [#allocation7], 4
      %s173 = int_to_ptr.vmem [resolvable:$true] %s172
      %178 = dma.vmem_to_hbm [thread:$0]  %s173, 512, %s3, [#allocation4], 256, 256, 16
    $region25: #{tpu_custom_call.1} parent=1 // pred_fallthru
      _
    // Predicated region
    $region26: #{tpu_custom_call.1} parent=1 // pred_check
      _
    $region27: #{tpu_custom_call.1} parent=1 // pred_check_branch
      %180 = sbr.rel (0) target = $region29
    $region28: #{tpu_custom_call.1} parent=1 // pred_region
      %181 = dma.done [#allocation4], 512
    $region29: #{tpu_custom_call.1} parent=1 // pred_fallthru
      _
    %182 = vsyncpa [#allocation3], 1
    %183 = vsyncpa [#allocation6], 1
    %184 = vsyncpa [#allocation4], 1

</llo_original>
